<compile_context>
chip_gen: v7x
topology: tpu7x:2x2x1
jax: 0.10.0
libtpu: 0.0.40
codegen_flags: <defaults>
</compile_context>

<pallas_src>
import functools

import jax
import jax.numpy as jnp
from jax.experimental import pallas as pl
from jax.experimental.pallas import tpu as pltpu


def _link_ce_block_kernel(logits_ref, labels_ref, out_ref, *, num_losses):
    """Per-batch-tile 2-class cross-entropy, lane-major.

    logits_ref : (2*L, TB)  rows [0:L) = class-0 logits of every head,
                            rows [L:2L) = class-1 logits; lane axis = batch.
    labels_ref : (L, TB) int32  row 0 = global labels, rows 1.. = local labels.
    out_ref    : (1, TB) f32    per-batch-element CE summed over heads
                                (lane-dense partial sums; mean taken outside).
    """
    L = num_losses
    x = logits_ref[...].astype(jnp.float32)        # in-kernel f32 upcast (VPU)
    lab = labels_ref[...]                          # (L, TB) int32

    # Label term, hoisted & vectorized over heads: +1 for class 0, -1 for class 1.
    sign = (1 - 2 * lab).astype(jnp.float32)       # (L, TB)

    diff = x[L:, :] - x[:L, :]                     # l1 - l0, contiguous sublane slices
    z = sign * diff

    # 2-class CE == softplus(sign * (l1 - l0)), stable form:
    #   softplus(z) = max(z, 0) + log(1 + exp(-|z|))     (1 exp + 1 log on EUP)
    ce = jnp.maximum(z, 0.0) + jnp.log(1.0 + jnp.exp(-jnp.abs(z)))   # (L, TB)

    out_ref[...] = jnp.sum(ce, axis=0, keepdims=True)                # (1, TB)


def _reference(gloout, locout_list, glo_label, loc_labels):
    """Pure-JAX reference (mirrors torch.nn.CrossEntropyLoss + loss.mean()).

    Also used as the fused-XLA fast path for tiny workloads.
    """
    def ce(logits, labels):
        logits = logits.astype(jnp.float32)
        logp = jax.nn.log_softmax(logits, axis=-1)
        picked = jnp.take_along_axis(logp, labels[:, None].astype(jnp.int32), axis=-1)
        return -jnp.mean(picked)

    losses = [ce(gloout, glo_label)] + [ce(lo, loc_labels) for lo in locout_list]
    return jnp.mean(jnp.stack(losses))


def link_cross_entropy(gloout, locout, glo_label, loc_labels, *,
                       block_b=None, use_pallas=None, interpret=False):
    """JAX/Pallas equivalent of LinkCrossEntropy.forward with CrossEntropyLoss."""
    locout = list(locout)
    num_local = len(locout)
    L = num_local + 1                    # number of scalar losses (global + locals)
    B, C = gloout.shape
    assert C == 2, "LinkCrossEntropy Pallas kernel specialized for 2-class heads"
    # TODO(synk): generalize to C > 2 with a class-tiled online log-sum-exp kernel.
    # TODO(synk): labels outside {0,1} (incl. PyTorch ignore_index=-100) unsupported.

    if use_pallas is None:
        # Tiny workloads (a few hundred bytes of logits) are launch/DMA-overhead
        # bound; a fused XLA expression wins there.  Pallas pays off at large B.
        use_pallas = B * L >= 4096
    if not use_pallas:
        return _reference(gloout, locout, glo_label, loc_labels)

    # ---- layout plumbing only (no compute): lane-major, 2 consolidated operands ----
    heads = jnp.stack([gloout] + locout, axis=0)                   # (L, B, 2)
    slab = jnp.transpose(heads, (2, 0, 1)).reshape(2 * L, B)       # (2L, B): [all l0 ; all l1]
    glo = glo_label.astype(jnp.int32).reshape(1, B)
    loc = loc_labels.astype(jnp.int32).reshape(1, B)
    labels = jnp.concatenate([glo, jnp.broadcast_to(loc, (num_local, B))], axis=0)  # (L, B)

    # ---- batch (lane) tiling: one full block when small, 128-aligned tiles when big ----
    if block_b is None:
        block_b = B if B <= 65536 else 32768     # tiles stay far under scoped-VMEM defaults
    if block_b < B:
        block_b = ((block_b + 127) // 128) * 128  # non-full lane tiles must be 128-aligned
    if block_b >= B:
        block_b = B                               # single full-extent block, no padding
    nb = pl.cdiv(B, block_b)
    Bp = nb * block_b
    pad = Bp - B
    if pad:
        # Padded batch columns contribute exactly zero loss:
        #   class-0 logit 0, class-1 logit -1e9, label 0  ->  softplus(-1e9) == 0.
        pad_logits = jnp.concatenate(
            [jnp.zeros((L, pad), slab.dtype),
             jnp.full((L, pad), -1e9, slab.dtype)], axis=0)        # (2L, pad)
        slab = jnp.concatenate([slab, pad_logits], axis=1)
        labels = jnp.concatenate([labels, jnp.zeros((L, pad), jnp.int32)], axis=1)

    kernel = functools.partial(_link_ce_block_kernel, num_losses=L)
    partial_ce = pl.pallas_call(
        kernel,
        out_shape=jax.ShapeDtypeStruct((1, Bp), jnp.float32),
        grid=(nb,),
        in_specs=[
            pl.BlockSpec((2 * L, block_b), lambda i: (0, i)),      # logits slab
            pl.BlockSpec((L, block_b), lambda i: (0, i)),          # labels
        ],
        out_specs=pl.BlockSpec((1, block_b), lambda i: (0, i)),    # lane-dense partials
        compiler_params=pltpu.CompilerParams(
            dimension_semantics=("parallel",)),                    # megacore-shard batch tiles
        interpret=interpret,
    )(slab, labels)

    # mean over heads of per-head batch means == total / (B * L)  (all heads share B).
    return jnp.sum(partial_ce) / (float(B) * float(L))


if __name__ == "__main__":
    key = jax.random.PRNGKey(0)
    C = 2            # gloout / locout[i] are batch x 2 (per module docstring)
    NUM_LOCAL = 3    # number of local heads

    # --- Test 1: small batch, single full block (grid=(1,)) ---
    B = 8
    k_glo, k_loc, k_gl, k_ll = jax.random.split(key, 4)
    gloout = jax.random.normal(k_glo, (B, C), dtype=jnp.float32)
    locout = [
        jax.random.normal(jax.random.fold_in(k_loc, i), (B, C), dtype=jnp.float32)
        for i in range(NUM_LOCAL)
    ]
    glo_label = jax.random.randint(k_gl, (B,), 0, C, dtype=jnp.int32)
    loc_labels = jax.random.randint(k_ll, (B,), 0, C, dtype=jnp.int32)

    loss = jax.block_until_ready(
        link_cross_entropy(gloout, locout, glo_label, loc_labels, use_pallas=True))
    ref = _reference(gloout, locout, glo_label, loc_labels)
    assert jnp.allclose(loss, ref, rtol=1e-5, atol=1e-5), (loss, ref)

    # --- Test 2: batch tiling + padding path (grid=(2,), 128-lane blocks, B % block != 0) ---
    B2 = 200
    k2 = jax.random.fold_in(key, 1)
    k_glo2, k_loc2, k_gl2, k_ll2 = jax.random.split(k2, 4)
    gloout2 = jax.random.normal(k_glo2, (B2, C), dtype=jnp.float32)
    locout2 = [
        jax.random.normal(jax.random.fold_in(k_loc2, i), (B2, C), dtype=jnp.float32)
        for i in range(NUM_LOCAL)
    ]
    glo_label2 = jax.random.randint(k_gl2, (B2,), 0, C, dtype=jnp.int32)
    loc_labels2 = jax.random.randint(k_ll2, (B2,), 0, C, dtype=jnp.int32)

    loss2 = jax.block_until_ready(
        link_cross_entropy(gloout2, locout2, glo_label2, loc_labels2,
                           use_pallas=True, block_b=128))
    ref2 = _reference(gloout2, locout2, glo_label2, loc_labels2)
    assert jnp.allclose(loss2, ref2, rtol=1e-5, atol=1e-5), (loss2, ref2)

    # --- Test 3: auto-dispatch (tiny workload -> fused-XLA fallback, same result) ---
    loss3 = jax.block_until_ready(
        link_cross_entropy(gloout, locout, glo_label, loc_labels))
    assert jnp.allclose(loss3, ref, rtol=1e-5, atol=1e-5), (loss3, ref)

    print("KERNEL_OK")
</pallas_src>

<mosaic_0001>
module attributes {stable_mosaic.version = 11 : i64} {
  func.func @_link_ce_block_kernel(%arg0: i32, %arg1: memref<8x8xf32, #tpu.memory_space<vmem>>, %arg2: memref<4x8xi32, #tpu.memory_space<vmem>>, %arg3: memref<1x8xf32, #tpu.memory_space<vmem>>) attributes {dimension_semantics = [#tpu.dimension_semantics<parallel>], iteration_bounds = array<i64: 1>, scalar_prefetch = 0 : i64, scratch_operands = 0 : i64, tpu.core_type = #tpu.core_type<tc>, window_params = [{transform_indices = @transform_0, window_bounds = array<i64: 8, 8>}, {transform_indices = @transform_1, window_bounds = array<i64: 4, 8>}, {transform_indices = @transform_2, window_bounds = array<i64: 1, 8>}]} {
    %c0 = arith.constant 0 : index
    %c0_0 = arith.constant 0 : index
    %0 = vector.load %arg1[%c0, %c0_0] : memref<8x8xf32, #tpu.memory_space<vmem>>, vector<8x8xf32>
    %c0_1 = arith.constant 0 : index
    %c0_2 = arith.constant 0 : index
    %1 = vector.load %arg2[%c0_1, %c0_2] : memref<4x8xi32, #tpu.memory_space<vmem>>, vector<4x8xi32>
    %c2_i32 = arith.constant 2 : i32
    %2 = vector.broadcast %c2_i32 : i32 to vector<4x8xi32>
    %3 = arith.muli %2, %1 : vector<4x8xi32>
    %c1_i32 = arith.constant 1 : i32
    %4 = vector.broadcast %c1_i32 : i32 to vector<4x8xi32>
    %5 = arith.subi %4, %3 : vector<4x8xi32>
    %6 = arith.sitofp %5 : vector<4x8xi32> to vector<4x8xf32>
    %7 = vector.extract_strided_slice %0 {offsets = [4, 0], sizes = [4, 8], strides = [1, 1]} : vector<8x8xf32> to vector<4x8xf32>
    %8 = vector.extract_strided_slice %0 {offsets = [0, 0], sizes = [4, 8], strides = [1, 1]} : vector<8x8xf32> to vector<4x8xf32>
    %9 = arith.subf %7, %8 : vector<4x8xf32>
    %10 = arith.mulf %6, %9 : vector<4x8xf32>
    %cst = arith.constant 0.000000e+00 : f32
    %11 = vector.broadcast %cst : f32 to vector<4x8xf32>
    %12 = arith.maximumf %10, %11 : vector<4x8xf32>
    %13 = math.absf %10 : vector<4x8xf32>
    %cst_3 = arith.constant 0.000000e+00 : f32
    %14 = vector.broadcast %cst_3 : f32 to vector<4x8xf32>
    %15 = arith.subf %14, %13 : vector<4x8xf32>
    %16 = math.exp %15 : vector<4x8xf32>
    %cst_4 = arith.constant 1.000000e+00 : f32
    %17 = vector.broadcast %cst_4 : f32 to vector<4x8xf32>
    %18 = arith.addf %17, %16 : vector<4x8xf32>
    %19 = math.log %18 : vector<4x8xf32>
    %20 = arith.addf %12, %19 : vector<4x8xf32>
    %cst_5 = arith.constant dense<0.000000e+00> : vector<8xf32>
    %21 = vector.multi_reduction <add>, %20, %cst_5 [0] : vector<4x8xf32> to vector<8xf32>
    %22 = vector.shape_cast %21 : vector<8xf32> to vector<1x8xf32>
    %c0_6 = arith.constant 0 : index
    %c0_7 = arith.constant 0 : index
    %23 = vector.load %arg3[%c0_6, %c0_7] : memref<1x8xf32, #tpu.memory_space<vmem>>, vector<1x8xf32>
    tpu.vector_store %arg3[%c0_6, %c0_7], %22 {strides = array<i32>} : memref<1x8xf32, #tpu.memory_space<vmem>>, vector<1x8xf32>,
    return
  }
  func.func @transform_0(%arg0: i32) -> (i32, i32) {
    %c0_i32 = arith.constant 0 : i32
    %c0_i32_0 = arith.constant 0 : i32
    return %c0_i32, %arg0 : i32, i32
  }
  func.func @transform_1(%arg0: i32) -> (i32, i32) {
    %c0_i32 = arith.constant 0 : i32
    %c0_i32_0 = arith.constant 0 : i32
    return %c0_i32, %arg0 : i32, i32
  }
  func.func @transform_2(%arg0: i32) -> (i32, i32) {
    %c0_i32 = arith.constant 0 : i32
    %c0_i32_0 = arith.constant 0 : i32
    return %c0_i32, %arg0 : i32, i32
  }
}

</mosaic_0001>

<llo_original>
// kernel: tpu_custom_call.1
$region0: #{tpu_custom_call.1}
  #allocation0 [shape = 'u32[]', space=smem, size = 0x4, offset = 0x4, fixed_abs, tag = 'smem constant byte address 0x4 - core index']
  #allocation1 [shape = 'u32[144,128]{1,0:T(1,128)}', space=vmem, size = 0x12000, scoped, tag = 'internal scratch']
  %s0 = inlined_call_operand.hbm [shape: f32[8,8], index: 0, kind: input, shape index: {}]
  %s1 = inlined_call_operand.hbm [shape: s32[4,8], index: 1, kind: input, shape index: {}]
  %s2 = inlined_call_operand.hbm [shape: f32[1,8], index: 2, kind: output, shape index: {}]
  %s3 = sld [smem:[#allocation0]]
  $region26: #{tpu_custom_call.1} parent=0
    _
  %s5 = ssub.s32 1, %s3
  %s6 = scalar_select 0, %s5, %s3
  $region1: #{tpu_custom_call.1} parent=0
    #allocation2 [shape = 'u8[4096]{0}', space=vmem, size = 0x1000, scoped, tag = 'input window, operand 0, single buffered']
    #allocation3 [shape = 's32[1]{0}', space=sflag, size = 0x4, scoped, tag = 'scoped memory for tpu_custom_call.1']
    #allocation4 [shape = 's32[1]{0}', space=sflag, size = 0x4, scoped, tag = 'scoped memory for tpu_custom_call.1']
    #allocation5 [shape = 'u8[2048]{0}', space=vmem, size = 0x800, scoped, tag = 'input window, operand 1, single buffered']
    #allocation6 [shape = 's32[1]{0}', space=sflag, size = 0x4, scoped, tag = 'scoped memory for tpu_custom_call.1']
    #allocation7 [shape = 'u8[512]{0}', space=vmem, size = 0x400, scoped, tag = 'output window, operand 0, single buffered']
    %7 = vsyncpa [#allocation3], 0
    %8 = vsyncpa [#allocation6], 0
    %9 = vsyncpa [#allocation4], 0
    // Predicated region
    $region2: #{tpu_custom_call.1} parent=1 // pred_check
      _
    $region3: #{tpu_custom_call.1} parent=1 // pred_check_branch
      %11 = sbr.rel (0) target = $region5
    $region4: #{tpu_custom_call.1} parent=1 // pred_region
      %s13 = ssub.s32 128, 128
      %14 = vsyncadd [#allocation3], %s13
      %s16 = sshll.u32 [#allocation2], 4
      %s17 = int_to_ptr.vmem [resolvable:$true] %s16
      %19 = dma.hbm_to_vmem [thread:$0]  %s0, 128, %s17, [#allocation3]
    $region5: #{tpu_custom_call.1} parent=1 // pred_fallthru
      _
    // Predicated region
    $region6: #{tpu_custom_call.1} parent=1 // pred_check
      _
    $region7: #{tpu_custom_call.1} parent=1 // pred_check_branch
      %21 = sbr.rel (0) target = $region9
    $region8: #{tpu_custom_call.1} parent=1 // pred_region
      %s23 = ssub.s32 64, 64
      %24 = vsyncadd [#allocation6], %s23
      %s26 = sshll.u32 [#allocation5], 4
      %s27 = int_to_ptr.vmem [resolvable:$true] %s26
      %29 = dma.hbm_to_vmem [thread:$0]  %s1, 64, %s27, [#allocation6]
    $region9: #{tpu_custom_call.1} parent=1 // pred_fallthru
      _
    // Predicated region
    $region10: #{tpu_custom_call.1} parent=1 // pred_check
      _
    $region11: #{tpu_custom_call.1} parent=1 // pred_check_branch
      %31 = sbr.rel (0) target = $region13
    $region12: #{tpu_custom_call.1} parent=1 // pred_region
      %32 = dma.done [#allocation3], 128
    $region13: #{tpu_custom_call.1} parent=1 // pred_fallthru
      _
    // Predicated region
    $region14: #{tpu_custom_call.1} parent=1 // pred_check
      _
    $region15: #{tpu_custom_call.1} parent=1 // pred_check_branch
      %34 = sbr.rel (0) target = $region17
    $region16: #{tpu_custom_call.1} parent=1 // pred_region
      %35 = dma.done [#allocation6], 64
    $region17: #{tpu_custom_call.1} parent=1 // pred_fallthru
      _
    %v36 = vld [vmem:[#allocation2] sm:$0xff]
    %v37 = vld [vmem:[#allocation5] sm:$0xf]
    %v38 = vmul.u32 %v37, 2
    %v39 = vsub.s32 1, %v38
    %v40 = vcvt.s32.f32 %v39
    %v42 = vrot.slane %v36, 4
    %v44 = vsub.f32 %v36, %v42
    %v46 = vrot.slane %v44, 4
    %v48 = vmul.f32 %v40, %v46
    %v49 = vmax.f32 %v48, 0.0
    %v50 = vand.u32 2147483647, %v48
    %v51 = vsub.f32 0.0, %v50
    %v52 = vmul.f32 %v51, 1.442695
    %v53 = vpow.pop %v52
    %v54 = vadd.f32 %v53, 1.0
    %v55 = vlog2.pop %v54
    %v56 = vmul.f32 %v55, 0.6931472
    %v57 = vadd.f32 %v49, %v56
    %vm58 = vcmask 60416
    %v59 = vsel %vm58, %v57, 0.0
    %v60 = vrot.slane %v59, 4
    %v61 = vadd.f32 %v59, %v60
    %v62 = vrot.slane %v61, 2
    %v63 = vadd.f32 %v61, %v62
    %v64 = vrot.slane %v63, 1
    %v65 = vadd.f32 %v63, %v64
    %vm66 = vcmask 57344
    %67 = vst.msk [vmem:[#allocation7] sm:$0x1] %vm66, %v65
    // Predicated region
    $region18: #{tpu_custom_call.1} parent=1 // pred_check
      _
    $region19: #{tpu_custom_call.1} parent=1 // pred_check_branch
      %69 = sbr.rel (0) target = $region21
    $region20: #{tpu_custom_call.1} parent=1 // pred_region
      %s71 = ssub.s32 16, 16
      %72 = vsyncadd [#allocation4], %s71
      %s74 = sshll.u32 [#allocation7], 4
      %s75 = int_to_ptr.vmem [resolvable:$true] %s74
      %77 = dma.vmem_to_hbm [thread:$0]  %s75, 16, %s2, [#allocation4]
    $region21: #{tpu_custom_call.1} parent=1 // pred_fallthru
      _
    // Predicated region
    $region22: #{tpu_custom_call.1} parent=1 // pred_check
      _
    $region23: #{tpu_custom_call.1} parent=1 // pred_check_branch
      %79 = sbr.rel (0) target = $region25
    $region24: #{tpu_custom_call.1} parent=1 // pred_region
      %80 = dma.done [#allocation4], 16
    $region25: #{tpu_custom_call.1} parent=1 // pred_fallthru
      _
    %81 = vsyncpa [#allocation3], 1
    %82 = vsyncpa [#allocation6], 1
    %83 = vsyncpa [#allocation4], 1

</llo_original>
